<compile_context>
chip_gen: v7x
topology: tpu7x:2x2x1
jax: 0.10.0
libtpu: 0.0.40
codegen_flags: <defaults>
</compile_context>

<pallas_src>
import jax
import jax.numpy as jnp
import numpy as np
from jax.experimental import pallas as pl
from jax.experimental.pallas import tpu as pltpu

LANE = 128
MAX_TILE = 65536   # upper bound on pixels per grid step (32k-64k sweet spot)
MIN_TILE = 8192    # never shrink below this just to create extra grid steps
MIN_STEPS = 8      # target total grid steps (pipeline depth + v7x megacore)


def _round_up(x, m):
    return ((x + m - 1) // m) * m


def _choose_thw(hw, n):
    """Pick the spatial tile (lane axis) and the padded H*W.

    Prefers a 128-multiple divisor of hw -> no wrapper-side pad and no output
    slice.  Tiles are as large as possible (<= MAX_TILE) to amortize the fixed
    per-step overhead; if that leaves fewer than MIN_STEPS total grid steps we
    drop to a smaller divisor (but never below MIN_TILE).
    """
    cap = min(MAX_TILE, _round_up(hw, LANE))
    if hw % LANE == 0:
        units = hw // LANE
        divs = [d * LANE for d in range(1, min(units, cap // LANE) + 1)
                if units % d == 0]
        thw = divs[-1]
        if n * (hw // thw) < MIN_STEPS:
            for t in reversed(divs):
                if t < MIN_TILE:
                    break
                if n * (hw // t) >= MIN_STEPS:
                    thw = t
                    break
        return thw, hw
    # Ragged H*W (not a multiple of 128): fall back to padding; padded labels
    # are -1 and therefore ignored by the loss.
    # TODO(synk): replace this fallback with in-kernel tail masking (scalar-
    # prefetched hw + lane iota) to avoid the extra pad/slice HBM passes.
    thw = cap
    return thw, _round_up(hw, thw)


def _fused_model_loss_kernel(x_ref, wt_ref, b_ref, lab_ref, logits_ref, stats_ref):
    """Per (image, spatial-tile) step:
         logits^T = W^T @ X^T + b     (channel-major, lane-dense)
       then emit this tile's masked-CE partial sum and valid-pixel count.
    """
    x = x_ref[0].astype(jnp.float32)          # (Cin, THW)
    wt = wt_ref[...].astype(jnp.float32)      # (K, Cin)
    b = b_ref[...].astype(jnp.float32)        # (K, 1)

    # (K, Cin) @ (Cin, THW) -> (K, THW): classes on sublanes, pixels on lanes.
    # Kept in f32 for output parity; with Cin=4/K=8 the matmul is nowhere near
    # the bottleneck (kernel is HBM / step-overhead bound), so bf16 operands
    # would buy nothing here.
    logits = jnp.dot(wt, x, preferred_element_type=jnp.float32) + b
    logits_ref[0] = logits.astype(logits_ref.dtype)

    labels = lab_ref[0]                        # (1, THW) int32

    # log-softmax cross-entropy over the class (sublane) axis, masked label>=0.
    # NOTE: 8x exp + 1x log per pixel run on the EUP; if profiling shows EUP as
    # the binding slot on v6e/v7x, compute exp(logits - m) in bf16 there.
    m = jnp.max(logits, axis=0, keepdims=True)                               # (1, THW)
    lse = m + jnp.log(jnp.sum(jnp.exp(logits - m), axis=0, keepdims=True))   # (1, THW)
    cls_idx = jax.lax.broadcasted_iota(jnp.int32, logits.shape, 0)           # (K, THW)
    label_logit = jnp.sum(jnp.where(cls_idx == labels, logits, 0.0),
                          axis=0, keepdims=True)                             # (1, THW)
    valid = (labels >= 0).astype(jnp.float32)                                # (1, THW)
    nll = (lse - label_logit) * valid

    # Merged per-tile partials (distinct output block per grid point).
    stats_ref[0, 0, 0] = jnp.sum(nll)
    stats_ref[0, 0, 1] = jnp.sum(valid)


def full_model_forward(inputs, labels, w, b, *, logits_dtype=None):
    """JAX equivalent of FullModel.forward(inputs, labels).

    logits_dtype: dtype for the returned logits (default: inputs.dtype).
    Passing jnp.bfloat16 halves the dominant HBM write (~30% of total bytes);
    the loss is always computed in f32 inside the kernel.
    """
    n, cin, h, wd = inputs.shape
    k = w.shape[1]
    hw = h * wd
    out_dtype = np.dtype(logits_dtype) if logits_dtype is not None else np.dtype(inputs.dtype)

    thw, hw_pad = _choose_thw(hw, n)
    num_tiles = hw_pad // thw

    # Channel-major views — pure reshapes, no transposes.
    x3 = inputs.reshape(n, cin, hw)
    lab3 = labels.reshape(n, 1, hw).astype(jnp.int32)
    if hw_pad != hw:  # rare ragged fallback (hw not a multiple of 128)
        x3 = jnp.pad(x3, ((0, 0), (0, 0), (0, hw_pad - hw)))
        lab3 = jnp.pad(lab3, ((0, 0), (0, 0), (0, hw_pad - hw)),
                       constant_values=-1)

    wt = jnp.asarray(w).T.reshape(k, cin)             # (K, Cin), tiny & resident
    b2 = jnp.asarray(b).reshape(k, 1)                 # (K, 1)

    # VMEM budget: double-buffered x / logits / labels tiles + f32 temporaries,
    # with 2x headroom.  Clamped to [32 MiB, 48 MiB] so it satisfies v5e's
    # 16 MiB / v7x's 32 MiB default scoped limits yet stays below v7x's 64 MiB
    # physical VMEM.
    bytes_per_pixel = (2 * cin * x3.dtype.itemsize        # x (double-buffered)
                       + 2 * k * out_dtype.itemsize        # logits (double-buffered)
                       + 2 * lab3.dtype.itemsize           # labels (double-buffered)
                       + (4 * k + 8) * 4)                  # f32 in-kernel temps (est.)
    vmem_limit = int(min(max(2 * bytes_per_pixel * thw, 32 << 20), 48 << 20))

    logits3, stats = pl.pallas_call(
        _fused_model_loss_kernel,
        out_shape=(
            jax.ShapeDtypeStruct((n, k, hw_pad), out_dtype),       # logits (N, K, HW)
            jax.ShapeDtypeStruct((n, num_tiles, 2), jnp.float32),  # (loss_sum, count)
        ),
        grid_spec=pltpu.PrefetchScalarGridSpec(
            num_scalar_prefetch=0,
            grid=(n, num_tiles),
            in_specs=[
                pl.BlockSpec((1, cin, thw), lambda i, j: (i, 0, j)),  # x tile
                pl.BlockSpec((k, cin), lambda i, j: (0, 0)),          # W^T (resident)
                pl.BlockSpec((k, 1), lambda i, j: (0, 0)),            # bias (resident)
                pl.BlockSpec((1, 1, thw), lambda i, j: (i, 0, j)),    # labels tile
            ],
            out_specs=[
                pl.BlockSpec((1, k, thw), lambda i, j: (i, 0, j)),    # logits tile
                pl.BlockSpec((1, 1, 2), lambda i, j: (i, j, 0),
                             memory_space=pltpu.SMEM),                # merged partials
            ],
        ),
        compiler_params=pltpu.CompilerParams(
            dimension_semantics=("parallel", "parallel"),
            vmem_limit_bytes=vmem_limit),
    )(x3, wt, b2, lab3)

    total_valid = jnp.sum(stats[..., 1])
    # Guard: loss = 0 when no pixel is valid (PyTorch's mean-reduction CE with
    # ignore_index would return NaN here) — intentional divergence.
    loss = jnp.sum(stats[..., 0]) / jnp.maximum(total_valid, 1.0)

    if hw_pad != hw:
        logits3 = logits3[:, :, :hw]
    outputs = logits3.reshape(n, k, h, wd)   # already channel-major: free reshape
    acc = 0                                  # forward() hardcodes acc = 0
    # TODO(synk): pixel_acc() exists on the module but is never called in forward.
    return jnp.expand_dims(loss, 0), outputs, acc


if __name__ == "__main__":
    key = jax.random.PRNGKey(0)
    k_x, k_lab, k_ign, k_w, k_b = jax.random.split(key, 5)

    N, CIN, H, W = 2, 4, 16, 16
    NUM_CLASSES = 8

    inputs = jax.random.normal(k_x, (N, CIN, H, W), dtype=jnp.float32)
    labels = jax.random.randint(k_lab, (N, H, W), 0, NUM_CLASSES, dtype=jnp.int32)
    # mark a few pixels as ignored (label < 0)
    ignore = jax.random.bernoulli(k_ign, 0.05, (N, H, W))
    labels = jnp.where(ignore, -1, labels)

    # deterministic synthetic model parameters (1x1 conv head)
    w = 0.1 * jax.random.normal(k_w, (CIN, NUM_CLASSES), dtype=jnp.float32)
    b = 0.01 * jax.random.normal(k_b, (NUM_CLASSES,), dtype=jnp.float32)

    loss_u, outputs, acc = full_model_forward(inputs, labels, w, b)
    jax.block_until_ready((loss_u, outputs))

    # Pure-JAX reference (1x1 conv head + masked mean cross-entropy).
    logits_ref = jnp.einsum("nchw,ck->nkhw", inputs, w) + b[None, :, None, None]
    lsm = jax.nn.log_softmax(logits_ref, axis=1)
    safe_lab = jnp.maximum(labels, 0)
    nll_ref = -jnp.take_along_axis(lsm, safe_lab[:, None], axis=1)[:, 0]
    valid = labels >= 0
    loss_ref = jnp.where(valid, nll_ref, 0.0).sum() / jnp.maximum(valid.sum(), 1)

    assert loss_u.shape == (1,)
    assert outputs.shape == (N, NUM_CLASSES, H, W)
    assert bool(jnp.isfinite(loss_u[0]))
    assert bool(jnp.allclose(loss_u[0], loss_ref, rtol=1e-2, atol=1e-2))
    assert bool(jnp.allclose(outputs, logits_ref, rtol=1e-2, atol=1e-2))

    # bf16 logits output: halves the dominant HBM write; loss math unchanged.
    loss_bf, out_bf, _ = full_model_forward(inputs, labels, w, b,
                                            logits_dtype=jnp.bfloat16)
    jax.block_until_ready((loss_bf, out_bf))
    assert out_bf.dtype == jnp.bfloat16
    assert bool(jnp.allclose(loss_bf[0], loss_u[0], rtol=1e-3, atol=1e-3))

    print("KERNEL_OK")
</pallas_src>

<mosaic_0001>
module attributes {stable_mosaic.version = 11 : i64} {
  func.func @_fused_model_loss_kernel(%arg0: i32, %arg1: i32, %arg2: memref<1x4x256xf32, #tpu.memory_space<vmem>>, %arg3: memref<8x4xf32, #tpu.memory_space<vmem>>, %arg4: memref<8x1xf32, #tpu.memory_space<vmem>>, %arg5: memref<1x1x256xi32, #tpu.memory_space<vmem>>, %arg6: memref<1x8x256xf32, #tpu.memory_space<vmem>>, %arg7: memref<1x1x2xf32, #tpu.memory_space<smem>>) attributes {dimension_semantics = [#tpu.dimension_semantics<parallel>, #tpu.dimension_semantics<parallel>], iteration_bounds = array<i64: 2, 1>, scalar_prefetch = 0 : i64, scratch_operands = 0 : i64, tpu.core_type = #tpu.core_type<tc>, window_params = [{transform_indices = @transform_0, window_bounds = array<i64: 1, 4, 256>}, {pipeline_mode = #tpu.pipeline_mode<synchronous>, transform_indices = @transform_1, window_bounds = array<i64: 8, 4>}, {pipeline_mode = #tpu.pipeline_mode<synchronous>, transform_indices = @transform_2, window_bounds = array<i64: 8, 1>}, {transform_indices = @transform_3, window_bounds = array<i64: 1, 1, 256>}, {transform_indices = @transform_4, window_bounds = array<i64: 1, 8, 256>}, {transform_indices = @transform_5, window_bounds = array<i64: 1, 1, 2>}]} {
    %c0 = arith.constant 0 : index
    %c0_0 = arith.constant 0 : index
    %c0_1 = arith.constant 0 : index
    %0 = vector.load %arg2[%c0, %c0_0, %c0_1] : memref<1x4x256xf32, #tpu.memory_space<vmem>>, vector<1x4x256xf32>
    %1 = vector.shape_cast %0 : vector<1x4x256xf32> to vector<4x256xf32>
    %c0_2 = arith.constant 0 : index
    %c0_3 = arith.constant 0 : index
    %2 = vector.load %arg3[%c0_2, %c0_3] : memref<8x4xf32, #tpu.memory_space<vmem>>, vector<8x4xf32>
    %c0_4 = arith.constant 0 : index
    %c0_5 = arith.constant 0 : index
    %3 = vector.load %arg4[%c0_4, %c0_5] : memref<8x1xf32, #tpu.memory_space<vmem>>, vector<8x1xf32>
    %cst = arith.constant dense<0.000000e+00> : vector<8x256xf32>
    %4 = tpu.matmul %2, %1, %cst {dimension_numbers = #tpu.dot_dimension_numbers<[1], [0], [0], [1], [0, 0, 1, 1], [], []>} : vector<8x4xf32>, vector<4x256xf32>, vector<8x256xf32> -> vector<8x256xf32>
    %5 = vector.broadcast %3 : vector<8x1xf32> to vector<8x256xf32>
    %6 = arith.addf %4, %5 : vector<8x256xf32>
    %c0_6 = arith.constant 0 : index
    %c0_7 = arith.constant 0 : index
    %c0_8 = arith.constant 0 : index
    %7 = vector.load %arg6[%c0_6, %c0_7, %c0_8] : memref<1x8x256xf32, #tpu.memory_space<vmem>>, vector<1x8x256xf32>
    %8 = vector.shape_cast %7 : vector<1x8x256xf32> to vector<8x256xf32>
    %9 = vector.shape_cast %6 : vector<8x256xf32> to vector<1x8x256xf32>
    tpu.vector_store %arg6[%c0_6, %c0_7, %c0_8], %9 {strides = array<i32>} : memref<1x8x256xf32, #tpu.memory_space<vmem>>, vector<1x8x256xf32>,
    %c0_9 = arith.constant 0 : index
    %c0_10 = arith.constant 0 : index
    %c0_11 = arith.constant 0 : index
    %10 = vector.load %arg5[%c0_9, %c0_10, %c0_11] : memref<1x1x256xi32, #tpu.memory_space<vmem>>, vector<1x1x256xi32>
    %11 = vector.shape_cast %10 : vector<1x1x256xi32> to vector<1x256xi32>
    %cst_12 = arith.constant dense<0xFF800000> : vector<256xf32>
    %12 = vector.multi_reduction <maximumf>, %6, %cst_12 [0] : vector<8x256xf32> to vector<256xf32>
    %13 = vector.shape_cast %12 : vector<256xf32> to vector<1x256xf32>
    %14 = vector.broadcast %13 : vector<1x256xf32> to vector<8x256xf32>
    %15 = arith.subf %6, %14 : vector<8x256xf32>
    %16 = math.exp %15 : vector<8x256xf32>
    %cst_13 = arith.constant dense<0.000000e+00> : vector<256xf32>
    %17 = vector.multi_reduction <add>, %16, %cst_13 [0] : vector<8x256xf32> to vector<256xf32>
    %18 = vector.shape_cast %17 : vector<256xf32> to vector<1x256xf32>
    %19 = math.log %18 : vector<1x256xf32>
    %20 = arith.addf %13, %19 : vector<1x256xf32>
    %21 = tpu.iota {dimensions = array<i32: 0>} : vector<8x256xi32>
    %22 = vector.broadcast %11 : vector<1x256xi32> to vector<8x256xi32>
    %23 = arith.cmpi eq, %21, %22 : vector<8x256xi32>
    %cst_14 = arith.constant 0.000000e+00 : f32
    %24 = vector.broadcast %cst_14 : f32 to vector<8x256xf32>
    %25 = arith.select %23, %6, %24 : vector<8x256xi1>, vector<8x256xf32>
    %cst_15 = arith.constant dense<0.000000e+00> : vector<256xf32>
    %26 = vector.multi_reduction <add>, %25, %cst_15 [0] : vector<8x256xf32> to vector<256xf32>
    %27 = vector.shape_cast %26 : vector<256xf32> to vector<1x256xf32>
    %c0_i32 = arith.constant 0 : i32
    %28 = vector.broadcast %c0_i32 : i32 to vector<1x256xi32>
    %29 = arith.cmpi sge, %11, %28 : vector<1x256xi32>
    %30 = arith.extui %29 : vector<1x256xi1> to vector<1x256xi32>
    %31 = arith.sitofp %30 : vector<1x256xi32> to vector<1x256xf32>
    %32 = arith.subf %20, %27 : vector<1x256xf32>
    %33 = arith.mulf %32, %31 : vector<1x256xf32>
    %34 = vector.shape_cast %33 : vector<1x256xf32> to vector<1x1x256xf32>
    %cst_16 = arith.constant dense<0.000000e+00> : vector<1xf32>
    %35 = vector.multi_reduction <add>, %34, %cst_16 [1, 2] : vector<1x1x256xf32> to vector<1xf32>
    %36 = vector.shape_cast %35 : vector<1xf32> to vector<1x1x1xf32>
    %37 = vector.extract %36[0, 0, 0] : f32 from vector<1x1x1xf32>
    %c0_17 = arith.constant 0 : index
    %c0_18 = arith.constant 0 : index
    %c0_19 = arith.constant 0 : index
    %38 = memref.load %arg7[%c0_17, %c0_18, %c0_19] : memref<1x1x2xf32, #tpu.memory_space<smem>>
    memref.store %37, %arg7[%c0_17, %c0_18, %c0_19] : memref<1x1x2xf32, #tpu.memory_space<smem>>
    %39 = vector.shape_cast %31 : vector<1x256xf32> to vector<1x1x256xf32>
    %cst_20 = arith.constant dense<0.000000e+00> : vector<1xf32>
    %40 = vector.multi_reduction <add>, %39, %cst_20 [1, 2] : vector<1x1x256xf32> to vector<1xf32>
    %41 = vector.shape_cast %40 : vector<1xf32> to vector<1x1x1xf32>
    %42 = vector.extract %41[0, 0, 0] : f32 from vector<1x1x1xf32>
    %c0_21 = arith.constant 0 : index
    %c0_22 = arith.constant 0 : index
    %c1 = arith.constant 1 : index
    %43 = memref.load %arg7[%c0_21, %c0_22, %c1] : memref<1x1x2xf32, #tpu.memory_space<smem>>
    memref.store %42, %arg7[%c0_21, %c0_22, %c1] : memref<1x1x2xf32, #tpu.memory_space<smem>>
    return
  }
  func.func @transform_0(%arg0: i32, %arg1: i32) -> (i32, i32, i32) {
    %c0_i32 = arith.constant 0 : i32
    %c0_i32_0 = arith.constant 0 : i32
    return %arg0, %c0_i32, %arg1 : i32, i32, i32
  }
  func.func @transform_1(%arg0: i32, %arg1: i32) -> (i32, i32) {
    %c0_i32 = arith.constant 0 : i32
    %c0_i32_0 = arith.constant 0 : i32
    %c0_i32_1 = arith.constant 0 : i32
    return %c0_i32, %c0_i32_0 : i32, i32
  }
  func.func @transform_2(%arg0: i32, %arg1: i32) -> (i32, i32) {
    %c0_i32 = arith.constant 0 : i32
    %c0_i32_0 = arith.constant 0 : i32
    %c0_i32_1 = arith.constant 0 : i32
    return %c0_i32, %c0_i32_0 : i32, i32
  }
  func.func @transform_3(%arg0: i32, %arg1: i32) -> (i32, i32, i32) {
    %c0_i32 = arith.constant 0 : i32
    %c0_i32_0 = arith.constant 0 : i32
    return %arg0, %c0_i32, %arg1 : i32, i32, i32
  }
  func.func @transform_4(%arg0: i32, %arg1: i32) -> (i32, i32, i32) {
    %c0_i32 = arith.constant 0 : i32
    %c0_i32_0 = arith.constant 0 : i32
    return %arg0, %c0_i32, %arg1 : i32, i32, i32
  }
  func.func @transform_5(%arg0: i32, %arg1: i32) -> (i32, i32, i32) {
    %c0_i32 = arith.constant 0 : i32
    %c0_i32_0 = arith.constant 0 : i32
    return %arg0, %arg1, %c0_i32 : i32, i32, i32
  }
}

</mosaic_0001>

<llo_original>
// kernel: tpu_custom_call.1
$region0: #{tpu_custom_call.1}
  #allocation0 [shape = 'u32[]', space=smem, size = 0x4, offset = 0x4, fixed_abs, tag = 'smem constant byte address 0x4 - core index']
  #allocation1 [shape = 'u32[144,128]{1,0:T(1,128)}', space=vmem, size = 0x12000, scoped, tag = 'internal scratch']
  %s0 = inlined_call_operand.vmem [shape: f32[2,4,256], index: 0, kind: input, shape index: {}]
  %s1 = inlined_call_operand.vmem [shape: f32[8,4], index: 1, kind: input, shape index: {}]
  %s2 = inlined_call_operand.vmem [shape: f32[8,1], index: 2, kind: input, shape index: {}]
  %s3 = inlined_call_operand.vmem [shape: s32[2,1,256], index: 3, kind: input, shape index: {}]
  %s4 = inlined_call_operand.hbm [shape: f32[2,8,256], index: 4, kind: output, shape index: {0}]
  %s5 = inlined_call_operand.hbm [shape: f32[2,1,2], index: 5, kind: output, shape index: {1}]
  %6 = xla_tuple %s4, %s5
  %s7 = sld [smem:[#allocation0]]
  $region57: #{tpu_custom_call.1} parent=0
    _
  %s9 = ssub.s32 1, %s7
  %s10 = scalar_select 0, %s9, %s7
  $region1: #{tpu_custom_call.1} parent=0
    #allocation2 [shape = 'u8[16384]{0}', space=vmem, size = 0x4000, scoped, tag = 'output window, operand 0']
    #allocation3 [shape = 's32[2]{0}', space=sflag, size = 0x8, scoped, tag = 'scoped memory for tpu_custom_call.1']
    #allocation4 [shape = 's32[2]{0}', space=sflag, size = 0x8, scoped, tag = 'scoped memory for tpu_custom_call.1']
    #allocation5 [shape = 'u8[1024]{0}', space=smem, size = 0x400, scoped, tag = 'output window, operand 1']
    %11 = vsyncpa [#allocation3], 0
    %s12 = scalar_lea.sflag [#allocation3], 1
    %13 = vsyncpa %s12, 0
    %14 = vsyncpa [#allocation4], 0
    %s15 = scalar_lea.sflag [#allocation4], 1
    %16 = vsyncpa %s15, 0
    loop: start=0, step=1, limit=4
    $region2: #{tpu_custom_call.1} parent=1 // loop_pre_header
      _
    $region3: #{tpu_custom_call.1} parent=1 // loop_header
      %s18 = sphi 0, %s22
      %p19 = scmp.ge.s32.totalorder %s18, 4
      %s25 = sphi 0, %s37
      %s26 = sphi 0, %s33
      %s27 = sphi 0, %s25
      %s28 = sphi 0, %s26
      %s29 = sphi 0, %s27
      %s30 = sphi 0, %s28
      %s42 = sphi 0, %s44
      %s45 = sphi 0, %s42
      %s46 = sphi 0, %s45
      %s62 = sphi 0, %s46
      %s66 = sphi 0, %s66
      %s68 = sphi 0, %s66
      %s69 = sphi 0, %s68
      %s83 = sphi 0, %s69
      %s87 = sphi 0, %s87
      %s89 = sphi 0, %s87
      %s90 = sphi 0, %s89
      %s104 = sphi 0, %s90
      %s112 = sphi 0, %s114
      %s115 = sphi 0, %s112
      %s116 = sphi 0, %s115
      %s132 = sphi 0, %s116
      %s140 = sphi 0, %s142
      %s143 = sphi 0, %s140
      %s144 = sphi 0, %s143
      %s160 = sphi 0, %s144
      %s168 = sphi 0, %s170
      %s171 = sphi 0, %s168
      %s172 = sphi 0, %s171
      %s188 = sphi 0, %s172
    $region4: #{tpu_custom_call.1} parent=1 // loop_header_branch
      %21 = sbr.rel (%p19) target = $region8
    $region5: #{tpu_custom_call.1} parent=1 // loop_body
      %s23 = ssub.s32 %s18, 1
      %s24 = ssub.s32 %s18, 2
      %s31 = sadd.s32 1, %s26
      %p32 = scmp.ge.s32.totalorder %s31, 1
      %s33 = scalar_select %p32, 0, %s31
      %s34 = sadd.s32 1, %s25
      %s35 = scalar_select %p32, %s34, %s25
      %p36 = scmp.ge.s32.totalorder %s35, 2
      %s37 = scalar_select %p36, 0, %s35
      %s38 = ssub.s32 %s25, %s37
      %s39 = ssub.s32 %s26, %s33
      %s40 = sor.u32 %s38, %s39
      %p41 = scmp.eq.s32.totalorder %s40, 0
      %s43 = sadd.s32 %s42, 1
      %s44 = scalar_select %p41, %s42, %s43
      %p47 = pneg %p41
      %p48 = scmp.eq.s32.totalorder %s18, 1
      %p49 = por %p47, %p48
      %p50 = scmp.ne.s32.totalorder %s42, %s45
      %p51 = scmp.eq.s32.totalorder %s18, 0
      %p52 = por %p50, %p51
      %p53 = scmp.ne.s32.totalorder %s42, %s45
      %p54 = scmp.eq.s32.totalorder %s23, 1
      %p55 = por %p53, %p54
      %p56 = scmp.ne.s32.totalorder %s45, %s46
      %p57 = scmp.eq.s32.totalorder %s23, 0
      %p58 = por %p56, %p57
      %p59 = scmp.ne.s32.totalorder %s45, %s46
      %p60 = scmp.eq.s32.totalorder %s24, 1
      %p61 = por %p59, %p60
      %p63 = scmp.ne.s32.totalorder %s46, %s62
      %p64 = scmp.eq.s32.totalorder %s24, 0
      %p65 = por %p63, %p64
      %s67 = sadd.s32 %s66, 1
      %p70 = scmp.eq.s32.totalorder %s18, 1
      %p71 = scmp.ne.s32.totalorder %s66, %s68
      %p72 = scmp.eq.s32.totalorder %s18, 0
      %p73 = por %p71, %p72
      %p74 = scmp.ne.s32.totalorder %s66, %s68
      %p75 = scmp.eq.s32.totalorder %s23, 1
      %p76 = por %p74, %p75
      %p77 = scmp.ne.s32.totalorder %s68, %s69
      %p78 = scmp.eq.s32.totalorder %s23, 0
      %p79 = por %p77, %p78
      %p80 = scmp.ne.s32.totalorder %s68, %s69
      %p81 = scmp.eq.s32.totalorder %s24, 1
      %p82 = por %p80, %p81
      %p84 = scmp.ne.s32.totalorder %s69, %s83
      %p85 = scmp.eq.s32.totalorder %s24, 0
      %p86 = por %p84, %p85
      %s88 = sadd.s32 %s87, 1
      %p91 = scmp.eq.s32.totalorder %s18, 1
      %p92 = scmp.ne.s32.totalorder %s87, %s89
      %p93 = scmp.eq.s32.totalorder %s18, 0
      %p94 = por %p92, %p93
      %p95 = scmp.ne.s32.totalorder %s87, %s89
      %p96 = scmp.eq.s32.totalorder %s23, 1
      %p97 = por %p95, %p96
      %p98 = scmp.ne.s32.totalorder %s89, %s90
      %p99 = scmp.eq.s32.totalorder %s23, 0
      %p100 = por %p98, %p99
      %p101 = scmp.ne.s32.totalorder %s89, %s90
      %p102 = scmp.eq.s32.totalorder %s24, 1
      %p103 = por %p101, %p102
      %p105 = scmp.ne.s32.totalorder %s90, %s104
      %p106 = scmp.eq.s32.totalorder %s24, 0
      %p107 = por %p105, %p106
      %s108 = ssub.s32 %s25, %s37
      %s109 = ssub.s32 %s26, %s33
      %s110 = sor.u32 %s108, %s109
      %p111 = scmp.eq.s32.totalorder %s110, 0
      %s113 = sadd.s32 %s112, 1
      %s114 = scalar_select %p111, %s112, %s113
      %p117 = pneg %p111
      %p118 = scmp.eq.s32.totalorder %s18, 1
      %p119 = por %p117, %p118
      %p120 = scmp.ne.s32.totalorder %s112, %s115
      %p121 = scmp.eq.s32.totalorder %s18, 0
      %p122 = por %p120, %p121
      %p123 = scmp.ne.s32.totalorder %s112, %s115
      %p124 = scmp.eq.s32.totalorder %s23, 1
      %p125 = por %p123, %p124
      %p126 = scmp.ne.s32.totalorder %s115, %s116
      %p127 = scmp.eq.s32.totalorder %s23, 0
      %p128 = por %p126, %p127
      %p129 = scmp.ne.s32.totalorder %s115, %s116
      %p130 = scmp.eq.s32.totalorder %s24, 1
      %p131 = por %p129, %p130
      %p133 = scmp.ne.s32.totalorder %s116, %s132
      %p134 = scmp.eq.s32.totalorder %s24, 0
      %p135 = por %p133, %p134
      %s136 = ssub.s32 %s25, %s37
      %s137 = ssub.s32 %s26, %s33
      %s138 = sor.u32 %s136, %s137
      %p139 = scmp.eq.s32.totalorder %s138, 0
      %s141 = sadd.s32 %s140, 1
      %s142 = scalar_select %p139, %s140, %s141
      %p145 = pneg %p139
      %p146 = scmp.eq.s32.totalorder %s18, 1
      %p147 = por %p145, %p146
      %p148 = scmp.ne.s32.totalorder %s140, %s143
      %p149 = scmp.eq.s32.totalorder %s18, 0
      %p150 = por %p148, %p149
      %p151 = scmp.ne.s32.totalorder %s140, %s143
      %p152 = scmp.eq.s32.totalorder %s23, 1
      %p153 = por %p151, %p152
      %p154 = scmp.ne.s32.totalorder %s143, %s144
      %p155 = scmp.eq.s32.totalorder %s23, 0
      %p156 = por %p154, %p155
      %p157 = scmp.ne.s32.totalorder %s143, %s144
      %p158 = scmp.eq.s32.totalorder %s24, 1
      %p159 = por %p157, %p158
      %p161 = scmp.ne.s32.totalorder %s144, %s160
      %p162 = scmp.eq.s32.totalorder %s24, 0
      %p163 = por %p161, %p162
      %s164 = ssub.s32 %s25, %s37
      %s165 = ssub.s32 %s26, %s33
      %s166 = sor.u32 %s164, %s165
      %p167 = scmp.eq.s32.totalorder %s166, 0
      %s169 = sadd.s32 %s168, 1
      %s170 = scalar_select %p167, %s168, %s169
      %p173 = pneg %p167
      %p174 = scmp.eq.s32.totalorder %s18, 1
      %p175 = por %p173, %p174
      %p176 = scmp.ne.s32.totalorder %s168, %s171
      %p177 = scmp.eq.s32.totalorder %s18, 0
      %p178 = por %p176, %p177
      %p179 = scmp.ne.s32.totalorder %s168, %s171
      %p180 = scmp.eq.s32.totalorder %s23, 1
      %p181 = por %p179, %p180
      %p182 = scmp.ne.s32.totalorder %s171, %s172
      %p183 = scmp.eq.s32.totalorder %s23, 0
      %p184 = por %p182, %p183
      %p185 = scmp.ne.s32.totalorder %s171, %s172
      %p186 = scmp.eq.s32.totalorder %s24, 1
      %p187 = por %p185, %p186
      %p189 = scmp.ne.s32.totalorder %s172, %s188
      %p190 = scmp.eq.s32.totalorder %s24, 0
      %p191 = por %p189, %p190
      %p192 = scmp.le.s32.totalorder 1, %s18
      %p193 = scmp.lt.s32.totalorder %s18, 3
      %p194 = pnand %p192, %p193
      %p195 = pneg %p194
      // Predicated region
      $region9: #{tpu_custom_call.1} parent=5 // pred_check
        _
      $region10: #{tpu_custom_call.1} parent=5 // pred_check_branch
        %197 = sbr.rel (%p194) target = $region12
      $region11: #{tpu_custom_call.1} parent=5 // pred_region
        %s198 = ssub.s32 %s18, 1
        // Predicated region
        $region13: #{tpu_custom_call.1} parent=11 // pred_check
          %p199 = pneg %p79
        $region14: #{tpu_custom_call.1} parent=11 // pred_check_branch
          %201 = sbr.rel (%p199) target = $region16
        $region15: #{tpu_custom_call.1} parent=11 // pred_region
          _
        $region16: #{tpu_custom_call.1} parent=11 // pred_fallthru
          _
        // Predicated region
        $region17: #{tpu_custom_call.1} parent=11 // pred_check
          %p202 = pneg %p100
        $region18: #{tpu_custom_call.1} parent=11 // pred_check_branch
          %204 = sbr.rel (%p202) target = $region20
        $region19: #{tpu_custom_call.1} parent=11 // pred_region
          _
        $region20: #{tpu_custom_call.1} parent=11 // pred_fallthru
          _
      $region12: #{tpu_custom_call.1} parent=5 // pred_fallthru
        _
      %p205 = scmp.lt.s32.totalorder %s18, 2
      // Predicated region
      $region21: #{tpu_custom_call.1} parent=5 // pred_check
        %p206 = pneg %p205
      $region22: #{tpu_custom_call.1} parent=5 // pred_check_branch
        %208 = sbr.rel (%p206) target = $region24
      $region23: #{tpu_custom_call.1} parent=5 // pred_region
        // Predicated region
        $region25: #{tpu_custom_call.1} parent=23 // pred_check
          %p209 = pneg %p52
        $region26: #{tpu_custom_call.1} parent=23 // pred_check_branch
          %211 = sbr.rel (%p209) target = $region28
        $region27: #{tpu_custom_call.1} parent=23 // pred_region
          %s212 = smul.u32 2, %s26
          %p213 = scmp.lt.s32.totalorder %s25, 1
          %s214 = scalar_select %p213, %s25, 1
          %p215 = scmp.lt.s32.totalorder %s212, 1
          %s216 = scalar_select %p215, %s212, 1
          %s217 = smul.addr %s214, 2
          %s218 = sadd.s32 %s216, %s217
          %s219 = smul.addr %s218, 4
          %s220 = scalar_lea.vmem %s0, %s219
          %s221 = smul.u32 2, %s26
        $region28: #{tpu_custom_call.1} parent=23 // pred_fallthru
          _
        // Predicated region
        $region29: #{tpu_custom_call.1} parent=23 // pred_check
          %p222 = pneg %p122
        $region30: #{tpu_custom_call.1} parent=23 // pred_check_branch
          %224 = sbr.rel (%p222) target = $region32
        $region31: #{tpu_custom_call.1} parent=23 // pred_region
          %s225 = smul.u32 2, %s26
          %p226 = scmp.lt.s32.totalorder %s25, 1
          %s227 = scalar_select %p226, %s25, 1
          %p228 = scmp.lt.s32.totalorder %s225, 1
          %s229 = scalar_select %p228, %s225, 1
          %s230 = smul.addr %s227, 2
          %s231 = sadd.s32 %s229, %s230
          %s232 = scalar_lea.vmem %s3, %s231
          %s233 = smul.u32 2, %s26
        $region32: #{tpu_custom_call.1} parent=23 // pred_fallthru
          _
      $region24: #{tpu_custom_call.1} parent=5 // pred_fallthru
        _
      %p234 = scmp.le.s32.totalorder 1, %s18
      %p235 = scmp.lt.s32.totalorder %s18, 3
      %p236 = pnand %p234, %p235
      %p237 = pneg %p236
      // Predicated region
      $region33: #{tpu_custom_call.1} parent=5 // pred_check
        _
      $region34: #{tpu_custom_call.1} parent=5 // pred_check_branch
        %239 = sbr.rel (%p236) target = $region36
      $region35: #{tpu_custom_call.1} parent=5 // pred_region
        %s240 = ssub.s32 %s18, 1
        %s241 = smul.u32 2, %s28
        %p242 = scmp.lt.s32.totalorder %s27, 1
        %s243 = scalar_select %p242, %s27, 1
        %p244 = scmp.lt.s32.totalorder %s241, 1
        %s245 = scalar_select %p244, %s241, 1
        %s246 = smul.addr %s243, 2
        %s247 = sadd.s32 %s245, %s246
        %s248 = smul.addr %s247, 4
        %s249 = scalar_lea.vmem %s0, %s248
        %p250 = pneg %p58
        %p251 = pneg %p55
        %p252 = pneg %p79
        %p253 = pneg %p76
        %p254 = pneg %p100
        %p255 = pneg %p97
        %s256 = smul.u32 2, %s28
        %p257 = scmp.lt.s32.totalorder %s27, 1
        %s258 = scalar_select %p257, %s27, 1
        %p259 = scmp.lt.s32.totalorder %s256, 1
        %s260 = scalar_select %p259, %s256, 1
        %s261 = smul.addr %s258, 2
        %s262 = sadd.s32 %s260, %s261
        %s263 = scalar_lea.vmem %s3, %s262
        %p264 = pneg %p128
        %p265 = pneg %p125
        %p266 = pneg %p156
        %p267 = pneg %p153
        %s268 = sand.u32 %s143, 1
        %s269 = scalar_lea.sflag [#allocation3], %s268
        %s270 = sand.u32 %s143, 1
        %s271 = smul.addr %s270, 16
        %s272 = scalar_lea.vmem [#allocation2], %s271
        %p273 = pneg %p184
        %p274 = pneg %p181
        %s275 = sand.u32 %s171, 1
        %s276 = scalar_lea.sflag [#allocation4], %s275
        %s277 = sand.u32 %s171, 1
        %s278 = smul.addr %s277, 128
        %s279 = scalar_lea.smem [#allocation5], %s278
        %s280 = smul.u32 2, %s28
        %p281 = scmp.lt.s32.totalorder %s27, 1
        %s282 = scalar_select %p281, %s27, 1
        %p283 = scmp.lt.s32.totalorder %s280, 1
        %s284 = scalar_select %p283, %s280, 1
        %s285 = smul.addr %s282, 2
        %s286 = sadd.s32 %s284, %s285
        %s287 = smul.addr %s286, 4
        %s288 = scalar_lea.vmem %s0, %s287
        %s289 = smul.u32 2, %s28
        %s290 = smul.u32 2, %s28
        %p291 = scmp.lt.s32.totalorder %s27, 1
        %s292 = scalar_select %p291, %s27, 1
        %p293 = scmp.lt.s32.totalorder %s290, 1
        %s294 = scalar_select %p293, %s290, 1
        %s295 = smul.addr %s292, 2
        %s296 = sadd.s32 %s294, %s295
        %s297 = scalar_lea.vmem %s3, %s296
        %s298 = smul.u32 2, %s28
        %s299 = smul.u32 2, %s28
        %v300 = vld [vmem:[%s288] sm:$0xff]
        %v301 = vld [vmem:[%s1] sm:$0xff]
        %v302 = vld [vmem:[%s2] sm:$0xff]
        %304 = vset.pattern.permute.xlu0 0
        %305 = vperm.xlu0 %304, %v302
        %v306 = vpop.permute.xlu0 %305
        %v309 = vcombine.high %v300, %v300
        %vm310 = vcmask 31744
        %v312 = vsel %vm310, %v301, 0
        %vm314 = vcmask 1043456
        %v315 = vsel %vm314, %v300, 0
        %v317 = vsel %vm314, %v309, 0
        %319 = vmatprep.subr.mxu0 %v317
        %320 = vmatpush1.msra.mxu0 %v315
        %321 = vmatprep.subr.mxu0 0.0
        %322 = vmatpush1.msra.mxu0 0.0
        %323 = vmatprep.subr.mxu0 0.0
        %324 = vmatpush1.msra.mxu0 0.0
        %325 = vmatprep.subr.mxu0 0.0
        %326 = vmatpush1.msra.mxu0 0.0
        %327 = vmatprep.subr.mxu0 0.0
        %328 = vmatpush1.msra.mxu0 0.0
        %329 = vmatprep.subr.mxu0 0.0
        %330 = vmatpush1.msra.mxu0 0.0
        %331 = vmatprep.subr.mxu0 0.0
        %332 = vmatpush1.msra.mxu0 0.0
        %333 = vmatprep.subr.mxu0 0.0
        %334 = vmatpush1.msra.mxu0 0.0
        %335 = vmatprep.subr.mxu0 0.0
        %336 = vmatpush1.msra.mxu0 0.0
        %337 = vmatprep.subr.mxu0 0.0
        %338 = vmatpush1.msra.mxu0 0.0
        %339 = vmatprep.subr.mxu0 0.0
        %340 = vmatpush1.msra.mxu0 0.0
        %341 = vmatprep.subr.mxu0 0.0
        %342 = vmatpush1.msra.mxu0 0.0
        %343 = vmatprep.subr.mxu0 0.0
        %344 = vmatpush1.msra.mxu0 0.0
        %345 = vmatprep.subr.mxu0 0.0
        %346 = vmatpush1.msra.mxu0 0.0
        %347 = vmatprep.subr.mxu0 0.0
        %348 = vmatpush1.msra.mxu0 0.0
        %349 = vmatprep.subr.mxu0 0.0
        %350 = vmatpush1.msra.mxu0 0.0
        %351 = vmatprep.subr.mxu0 0.0
        %352 = vmatpush1.msra.mxu0 0.0
        %353 = vmatprep.subr.mxu0 0.0
        %354 = vmatpush1.msra.mxu0 0.0
        %355 = vmatprep.subr.mxu0 0.0
        %356 = vmatpush1.msra.mxu0 0.0
        %357 = vmatprep.subr.mxu0 0.0
        %358 = vmatpush1.msra.mxu0 0.0
        %359 = vmatprep.subr.mxu0 0.0
        %360 = vmatpush1.msra.mxu0 0.0
        %361 = vmatprep.subr.mxu0 0.0
        %362 = vmatpush1.msra.mxu0 0.0
        %363 = vmatprep.subr.mxu0 0.0
        %364 = vmatpush1.msra.mxu0 0.0
        %365 = vmatprep.subr.mxu0 0.0
        %366 = vmatpush1.msra.mxu0 0.0
        %367 = vmatprep.subr.mxu0 0.0
        %368 = vmatpush1.msra.mxu0 0.0
        %369 = vmatprep.subr.mxu0 0.0
        %370 = vmatpush1.msra.mxu0 0.0
        %371 = vmatprep.subr.mxu0 0.0
        %372 = vmatpush1.msra.mxu0 0.0
        %373 = vmatprep.subr.mxu0 0.0
        %374 = vmatpush1.msra.mxu0 0.0
        %375 = vmatprep.subr.mxu0 0.0
        %376 = vmatpush1.msra.mxu0 0.0
        %377 = vmatprep.subr.mxu0 0.0
        %378 = vmatpush1.msra.mxu0 0.0
        %379 = vmatprep.subr.mxu0 0.0
        %380 = vmatpush1.msra.mxu0 0.0
        %381 = vmatprep.subr.mxu0 0.0
        %382 = vmatpush1.msra.mxu0 0.0
        %383 = vmatprep.mubr.f32.mxu0 0.0
        %384 = vmatmul.mubr.f32.gmra.mrb[0].mxu0 %v312
        %v385 = vpop.f32.mrb[0].mxu0
        %v386 = vadd.f32 %v306, %v385
        %v387 = vpop.f32.mrb[0].mxu0
        %v388 = vadd.f32 %v306, %v387
        %389 = vdwg.mxu0
        %390 = vst [vmem:[%s272] sm:$0xff] %v386
        %391 = vst [vmem:[%s272 + $0x8] sm:$0xff] %v388
        %v392 = vld [vmem:[%s297] sm:$0x3]
        %v393 = vrot.slane %v386, 4
        %v394 = vmax.f32 %v386, %v393
        %v395 = vrot.slane %v394, 2
        %v396 = vmax.f32 %v394, %v395
        %v397 = vrot.slane %v396, 1
        %v398 = vmax.f32 %v396, %v397
        %v399 = vrot.slane %v388, 4
        %v400 = vmax.f32 %v388, %v399
        %v401 = vrot.slane %v400, 2
        %v402 = vmax.f32 %v400, %v401
        %v403 = vrot.slane %v402, 1
        %v404 = vmax.f32 %v402, %v403
        %v405 = vsub.f32 %v386, %v398
        %v406 = vsub.f32 %v388, %v404
        %v407 = vmul.f32 %v405, 1.442695
        %v408 = vpow.pop %v407
        %v409 = vmul.f32 %v406, 1.442695
        %v410 = vpow.pop %v409
        %v411 = vrot.slane %v408, 4
        %v412 = vadd.f32 %v408, %v411
        %v413 = vrot.slane %v412, 2
        %v414 = vadd.f32 %v412, %v413
        %v415 = vrot.slane %v414, 1
        %v416 = vadd.f32 %v414, %v415
        %v417 = vrot.slane %v410, 4
        %v418 = vadd.f32 %v410, %v417
        %v419 = vrot.slane %v418, 2
        %v420 = vadd.f32 %v418, %v419
        %v421 = vrot.slane %v420, 1
        %v422 = vadd.f32 %v420, %v421
        %v423 = vlog2.pop %v416
        %v424 = vmul.f32 %v423, 0.6931472
        %v425 = vlog2.pop %v422
        %v426 = vmul.f32 %v425, 0.6931472
        %v427 = vadd.f32 %v398, %v424
        %v428 = vadd.f32 %v404, %v426
        %v429 = vlaneseq
        %v430 = vshrl.u32 %v429, 7
        %v431 = vlaneseq
        %v432 = vshrl.u32 %v431, 7
        %v433 = vsub.s32 0, %v432
        %v434 = vrot.slane %v392, %v433
        %v435 = vlaneseq
        %v436 = vshrl.u32 %v435, 7
        %v437 = vsub.s32 1, %v436
        %v438 = vrot.slane %v392, %v437
        %vm439 = vcmp.eq.s32.totalorder %v430, %v434
        %vm440 = vcmp.eq.s32.totalorder %v430, %v438
        %v441 = vsel %vm439, %v386, 0.0
        %v442 = vsel %vm440, %v388, 0.0
        %v443 = vrot.slane %v441, 4
        %v444 = vadd.f32 %v441, %v443
        %v445 = vrot.slane %v444, 2
        %v446 = vadd.f32 %v444, %v445
        %v447 = vrot.slane %v446, 1
        %v448 = vadd.f32 %v446, %v447
        %v449 = vrot.slane %v442, 4
        %v450 = vadd.f32 %v442, %v449
        %v451 = vrot.slane %v450, 2
        %v452 = vadd.f32 %v450, %v451
        %v453 = vrot.slane %v452, 1
        %v454 = vadd.f32 %v452, %v453
        %vm455 = vcmp.ge.s32.totalorder %v392, 0
        %v456 = vsel %vm455, 1, 0
        %v457 = vcvt.s32.f32 %v456
        %v458 = vsub.f32 %v427, %v448
        %v459 = vsub.f32 %v428, %v454
        %v461 = vlaneseq
        %v462 = vshrl.u32 %v461, 7
        %v463 = vsub.s32 0, %v462
        %v464 = vrot.slane %v457, %v463
        %v465 = vlaneseq
        %v466 = vshrl.u32 %v465, 7
        %v467 = vsub.s32 1, %v466
        %v468 = vrot.slane %v457, %v467
        %v471 = vmul.f32 %v458, %v464
        %v472 = vmul.f32 %v459, %v468
        %vm473 = vcmask 1040384
        %v474 = vsel %vm473, %v471, 0.0
        %v475 = vsel %vm473, %v472, 0.0
        %v476 = vadd.f32 %v474, %v475
        %477 = vadd.xlane.f32.xlu0 %v476
        %v478 = vpop.xlane.xlu0 %477
        %v479 = vrot.slane %v478, 4
        %v480 = vadd.f32 %v478, %v479
        %v481 = vrot.slane %v480, 2
        %v482 = vadd.f32 %v480, %v481
        %v483 = vrot.slane %v482, 1
        %v484 = vadd.f32 %v482, %v483
        %s485 = vtos %v484
        %s486 = scalar_lea.smem %s279, 0 [#allocation5]
        %487 = sst [smem:[%s486]] %s485
        %v488 = vsel %vm473, %v464, 0.0
        %v489 = vsel %vm473, %v468, 0.0
        %v490 = vadd.f32 %v488, %v489
        %491 = vadd.xlane.f32.xlu0 %v490
        %v492 = vpop.xlane.xlu0 %491
        %v493 = vrot.slane %v492, 4
        %v494 = vadd.f32 %v492, %v493
        %v495 = vrot.slane %v494, 2
        %v496 = vadd.f32 %v494, %v495
        %v497 = vrot.slane %v496, 1
        %v498 = vadd.f32 %v496, %v497
        %s499 = vtos %v498
        %s500 = scalar_lea.smem %s279, 1 [#allocation5]
        %501 = sst [smem:[%s500]] %s499
        %s502 = sand.u32 %s143, 1
        %s503 = scalar_lea.sflag [#allocation3], %s502
        %s504 = sand.u32 %s143, 1
        %s505 = smul.addr %s504, 16
        %s506 = scalar_lea.vmem [#allocation2], %s505
        %s507 = sand.u32 %s171, 1
        %s508 = scalar_lea.sflag [#allocation4], %s507
        %s509 = sand.u32 %s171, 1
        %s510 = smul.addr %s509, 128
        %s511 = scalar_lea.smem [#allocation5], %s510
        // Predicated region
        $region37: #{tpu_custom_call.1} parent=35 // pred_check
          %p512 = pneg %p153
        $region38: #{tpu_custom_call.1} parent=35 // pred_check_branch
          %514 = sbr.rel (%p512) target = $region40
        $region39: #{tpu_custom_call.1} parent=35 // pred_region
          %s515 = smul.u32 2, %s28
          %s517 = ssub.s32 256, 256
          %518 = vsyncadd %s503, %s517
          %s519 = smul.addr %s27, 2
          %s520 = sadd.s32 %s515, %s519
          %s521 = smul.addr %s520, 128
          %s522 = scalar_lea.hbm %s4, %s521
          %s524 = sshll.u32 %s506, 4
          %s525 = int_to_ptr.vmem [resolvable:$true] %s524
          %527 = dma.vmem_to_hbm [thread:$0]  %s525, 256, %s522, %s503
        $region40: #{tpu_custom_call.1} parent=35 // pred_fallthru
          _
        // Predicated region
        $region41: #{tpu_custom_call.1} parent=35 // pred_check
          %p528 = pneg %p181
        $region42: #{tpu_custom_call.1} parent=35 // pred_check_branch
          %530 = sbr.rel (%p528) target = $region44
        $region43: #{tpu_custom_call.1} parent=35 // pred_region
          %s532 = ssub.s32 16, 16
          %533 = vsyncadd %s508, %s532
          %s534 = sadd.s32 %s28, %s27
          %s535 = smul.addr %s534, 16
          %s536 = scalar_lea.hbm %s5, %s535
          %539 = dma.smem_to_hbm %s511, 16, %s536, %s508
        $region44: #{tpu_custom_call.1} parent=35 // pred_fallthru
          _
      $region36: #{tpu_custom_call.1} parent=5 // pred_fallthru
        _
      %p540 = scmp.le.s32.totalorder 2, %s18
      // Predicated region
      $region45: #{tpu_custom_call.1} parent=5 // pred_check
        %p541 = pneg %p540
      $region46: #{tpu_custom_call.1} parent=5 // pred_check_branch
        %543 = sbr.rel (%p541) target = $region48
      $region47: #{tpu_custom_call.1} parent=5 // pred_region
        %s544 = ssub.s32 %s18, 2
        // Predicated region
        $region49: #{tpu_custom_call.1} parent=47 // pred_check
          %p545 = pneg %p159
        $region50: #{tpu_custom_call.1} parent=47 // pred_check_branch
          %547 = sbr.rel (%p545) target = $region52
        $region51: #{tpu_custom_call.1} parent=47 // pred_region
          %s548 = sand.u32 %s144, 1
          %s549 = scalar_lea.sflag [#allocation3], %s548
          %s550 = sand.u32 %s144, 1
          %s551 = smul.addr %s550, 16
          %s552 = scalar_lea.vmem [#allocation2], %s551
          %553 = dma.done %s549, 256
        $region52: #{tpu_custom_call.1} parent=47 // pred_fallthru
          _
        // Predicated region
        $region53: #{tpu_custom_call.1} parent=47 // pred_check
          %p554 = pneg %p187
        $region54: #{tpu_custom_call.1} parent=47 // pred_check_branch
          %556 = sbr.rel (%p554) target = $region56
        $region55: #{tpu_custom_call.1} parent=47 // pred_region
          %s557 = sand.u32 %s172, 1
          %s558 = scalar_lea.sflag [#allocation4], %s557
          %s559 = sand.u32 %s172, 1
          %s560 = smul.addr %s559, 128
          %s561 = scalar_lea.smem [#allocation5], %s560
          %562 = dma.done %s558, 16
        $region56: #{tpu_custom_call.1} parent=47 // pred_fallthru
          _
        %563 = sfence
      $region48: #{tpu_custom_call.1} parent=5 // pred_fallthru
        _
    $region6: #{tpu_custom_call.1} parent=1 // loop_footer
      %s22 = sadd.s32 1, %s18
    $region7: #{tpu_custom_call.1} parent=1 // loop_footer_branch
      %17 = sbr.rel target = $region3
    $region8: #{tpu_custom_call.1} parent=1 // loop_exit
      _
    %564 = vsyncpa [#allocation3], 1
    %s565 = scalar_lea.sflag [#allocation3], 1
    %566 = vsyncpa %s565, 1
    %567 = vsyncpa [#allocation4], 1
    %s568 = scalar_lea.sflag [#allocation4], 1
    %569 = vsyncpa %s568, 1

</llo_original>
